<compile_context>
chip_gen: v7x
topology: tpu7x:2x2x1
jax: 0.10.0
libtpu: 0.0.40
codegen_flags: <defaults>
</compile_context>

<pallas_src>
import math

import jax
import jax.numpy as jnp
from jax.experimental import pallas as pl
from jax.experimental.pallas import tpu as pltpu


def _kl_loss_kernel(pre_ref, lab_ref, out_ref):
    """One (TB, C, TS) tile: C on sublanes, spatial on lanes.

    pre_ref, lab_ref : (TB, C, TS) native-dtype VMEM tiles
    out_ref          : (TB, TS)    KL divergence summed over the class dim C
    """
    x = pre_ref[...].astype(jnp.float32)
    t = lab_ref[...].astype(jnp.float32)

    # log_softmax over the class axis (torch dim=1 == tile axis 1).
    m = jnp.max(x, axis=1, keepdims=True)
    z = x - m
    lse = jnp.log(jnp.sum(jnp.exp(z), axis=1, keepdims=True))
    log_p = z - lse

    # nn.KLDivLoss(reduction='none'): xlogy(t, t) - t * log_p.
    # log_p is always finite, so the fused gated form is exact (0 where t == 0).
    t_safe = jnp.where(t > 0, t, 1.0)
    kl = jnp.where(t > 0, t * (jnp.log(t_safe) - log_p), 0.0)

    # .sum(dim=1)
    out_ref[...] = jnp.sum(kl, axis=1).astype(out_ref.dtype)


def _round_up(x: int, m: int) -> int:
    return -(-x // m) * m


def kl_loss(pre, label):
    """Pallas TPU forward of KLLoss:
         KLDivLoss(reduction='none')(log_softmax(pre, dim=1), label).sum(dim=1)

    pre, label : (B, C, *spatial) float arrays (any float dtype; cast happens in-kernel)
    returns    : (B, *spatial)
    """
    assert pre.shape == label.shape and pre.ndim >= 2
    B, C = pre.shape[0], pre.shape[1]
    spatial = pre.shape[2:]
    S = int(math.prod(spatial)) if spatial else 1

    # Free views on contiguous NCHW data: no transpose, no extra HBM materialization.
    pre3 = pre.reshape(B, C, S)
    lab3 = label.reshape(B, C, S)

    out_dtype = jnp.promote_types(pre.dtype, label.dtype)
    out_itemsize = jnp.dtype(out_dtype).itemsize
    in_itemsize = max(jnp.dtype(pre.dtype).itemsize, jnp.dtype(label.dtype).itemsize)

    # Sublane packing: 8 rows/vreg for 32-bit, 16 for bf16, 32 for 8-bit dtypes.
    in_pack = max(8, 32 // in_itemsize)
    out_pack = max(8, 32 // out_itemsize)
    padded_C = _round_up(C, in_pack)          # real VMEM / vreg footprint of the class dim

    # ---- generation-aware budgets ---------------------------------------------------
    try:
        vmem_capacity = int(pltpu.get_tpu_info().vmem_capacity_bytes)
    except Exception:  # pragma: no cover - conservative fallback (v7x-sized)
        vmem_capacity = 64 << 20
    vmem_budget = (3 * vmem_capacity) // 4
    # v7x (64 MiB VMEM, fast HBM): ~4 MiB per input tile. v5e/v6e (128 MiB): up to 8 MiB.
    target_bytes = (4 << 20) if vmem_capacity <= (64 << 20) else (8 << 20)

    # ---- spatial tile: lane-dense (multiple of 128), never the raw unaligned extent --
    if S < 128:
        TS = S                                # tiny spatial dim: full extent
    else:
        TS_cap = max(128, (target_bytes // (padded_C * in_itemsize)) // 128 * 128)
        TS = min((S // 128) * 128, TS_cap)    # <= S, multiple of 128; cdiv grid masks the tail

    # ---- batch tile: group rows toward the target; keep it output-pack aligned -------
    row_bytes = padded_C * TS * in_itemsize
    if B * row_bytes <= target_bytes:
        TB = B                                # full batch dim -> no sublane-alignment issue
    else:
        TB = max(out_pack, (target_bytes // row_bytes) // out_pack * out_pack)
        TB = min(TB, B)

    # ---- keep the whole working set (pipeline buffers + f32 temporaries) in budget ---
    def footprint(tb, ts):
        in_tile = tb * padded_C * ts * in_itemsize    # per input, per pipeline buffer
        out_tile = tb * ts * out_itemsize
        f32_tile = tb * padded_C * ts * 4             # in-kernel f32 temporaries
        return 4 * in_tile + 2 * out_tile + 4 * f32_tile

    while footprint(TB, TS) > vmem_budget and (
        TS > 128 or (TB > out_pack and TB % out_pack == 0)
    ):
        if TS > 128:
            TS = max(128, _round_up(TS // 2, 128))
        else:
            TB = max(out_pack, (TB // 2) // out_pack * out_pack)

    # ---- megacore (v7x has 2 TCs): ensure >= 2 parallel blocks when the problem allows
    def n_blocks(tb, ts):
        return pl.cdiv(B, tb) * pl.cdiv(S, ts)

    while n_blocks(TB, TS) < 2 and TS > 128:
        TS = max(128, _round_up(TS // 2, 128))
    if n_blocks(TB, TS) < 2 and B >= 2 * out_pack:
        TB = _round_up(pl.cdiv(B, 2), out_pack)

    grid = (pl.cdiv(B, TB), pl.cdiv(S, TS))

    # Note: batch/spatial tail blocks compute on padded lanes that are discarded on
    # writeback; results written to the real output extent are exact.
    needed = footprint(TB, TS) + (2 << 20)
    vmem_limit = int(min(max(needed, 16 << 20), vmem_budget))

    n_el = B * C * S
    cost = pl.CostEstimate(
        flops=10 * n_el,
        transcendentals=2 * n_el,
        bytes_accessed=n_el
        * (jnp.dtype(pre.dtype).itemsize + jnp.dtype(label.dtype).itemsize)
        + B * S * out_itemsize,
    )

    out = pl.pallas_call(
        _kl_loss_kernel,
        out_shape=jax.ShapeDtypeStruct((B, S), out_dtype),
        grid=grid,
        in_specs=[
            pl.BlockSpec((TB, C, TS), lambda b, s: (b, 0, s)),
            pl.BlockSpec((TB, C, TS), lambda b, s: (b, 0, s)),
        ],
        out_specs=pl.BlockSpec((TB, TS), lambda b, s: (b, s)),
        compiler_params=pltpu.CompilerParams(
            dimension_semantics=("parallel", "parallel"),
            vmem_limit_bytes=vmem_limit,
        ),
        cost_estimate=cost,
    )(pre3, lab3)

    return out.reshape((B,) + spatial)


def _reference_kl_loss(pre, label):
    """Pure-JAX reference matching the PyTorch forward."""
    x = pre.astype(jnp.float32)
    t = label.astype(jnp.float32)
    log_p = jax.nn.log_softmax(x, axis=1)
    kl = jnp.where(t > 0, t * jnp.log(jnp.where(t > 0, t, 1.0)), 0.0) - t * log_p
    return kl.sum(axis=1)


if __name__ == "__main__":
    key = jax.random.PRNGKey(0)

    def make_inputs(k, shape):
        k1, k2 = jax.random.split(k)
        pre = jax.random.normal(k1, shape, dtype=jnp.float32)
        raw = jax.random.uniform(k2, shape, dtype=jnp.float32)
        raw = jnp.where(raw < 0.2, 0.0, raw)  # exact zeros -> xlogy(0, 0) == 0 path
        label = raw / jnp.maximum(raw.sum(axis=1, keepdims=True), 1e-12)
        return pre, label

    k_a, k_b = jax.random.split(key)

    # Main case: lane-aligned spatial extent (16*16 = 256).
    pre, label = make_inputs(k_a, (2, 4, 16, 16))
    out = jax.block_until_ready(kl_loss(pre, label))
    ref = _reference_kl_loss(pre, label)
    assert out.shape == (2, 16, 16), out.shape
    assert jnp.allclose(out, ref, rtol=1e-5, atol=1e-5)

    # Robustness case: spatial extent NOT a multiple of 128 (15*15 = 225) ->
    # lane-dense 128-wide tiles with a masked tail block, no whole-extent fallback.
    pre2, label2 = make_inputs(k_b, (2, 4, 15, 15))
    out2 = jax.block_until_ready(kl_loss(pre2, label2))
    ref2 = _reference_kl_loss(pre2, label2)
    assert out2.shape == (2, 15, 15), out2.shape
    assert jnp.allclose(out2, ref2, rtol=1e-5, atol=1e-5)

    print("KERNEL_OK")
</pallas_src>

<mosaic_0001>
module attributes {stable_mosaic.version = 11 : i64} {
  func.func @_kl_loss_kernel(%arg0: i32, %arg1: i32, %arg2: memref<2x4x128xf32, #tpu.memory_space<vmem>>, %arg3: memref<2x4x128xf32, #tpu.memory_space<vmem>>, %arg4: memref<2x128xf32, #tpu.memory_space<vmem>>) attributes {dimension_semantics = [#tpu.dimension_semantics<parallel>, #tpu.dimension_semantics<parallel>], iteration_bounds = array<i64: 1, 2>, scalar_prefetch = 0 : i64, scratch_operands = 0 : i64, tpu.core_type = #tpu.core_type<tc>, window_params = [{transform_indices = @transform_0, window_bounds = array<i64: 2, 4, 128>}, {transform_indices = @transform_1, window_bounds = array<i64: 2, 4, 128>}, {transform_indices = @transform_2, window_bounds = array<i64: 2, 128>}]} {
    %c0 = arith.constant 0 : index
    %c0_0 = arith.constant 0 : index
    %c0_1 = arith.constant 0 : index
    %0 = vector.load %arg2[%c0, %c0_0, %c0_1] : memref<2x4x128xf32, #tpu.memory_space<vmem>>, vector<2x4x128xf32>
    %c0_2 = arith.constant 0 : index
    %c0_3 = arith.constant 0 : index
    %c0_4 = arith.constant 0 : index
    %1 = vector.load %arg3[%c0_2, %c0_3, %c0_4] : memref<2x4x128xf32, #tpu.memory_space<vmem>>, vector<2x4x128xf32>
    %cst = arith.constant dense<0xFF800000> : vector<2x128xf32>
    %2 = vector.multi_reduction <maximumf>, %0, %cst [1] : vector<2x4x128xf32> to vector<2x128xf32>
    %3 = vector.shape_cast %2 : vector<2x128xf32> to vector<2x1x128xf32>
    %4 = vector.broadcast %3 : vector<2x1x128xf32> to vector<2x4x128xf32>
    %5 = arith.subf %0, %4 : vector<2x4x128xf32>
    %6 = math.exp %5 : vector<2x4x128xf32>
    %cst_5 = arith.constant dense<0.000000e+00> : vector<2x128xf32>
    %7 = vector.multi_reduction <add>, %6, %cst_5 [1] : vector<2x4x128xf32> to vector<2x128xf32>
    %8 = vector.shape_cast %7 : vector<2x128xf32> to vector<2x1x128xf32>
    %9 = math.log %8 : vector<2x1x128xf32>
    %10 = vector.broadcast %9 : vector<2x1x128xf32> to vector<2x4x128xf32>
    %11 = arith.subf %5, %10 : vector<2x4x128xf32>
    %cst_6 = arith.constant 0.000000e+00 : f32
    %12 = vector.broadcast %cst_6 : f32 to vector<2x4x128xf32>
    %13 = arith.cmpf ogt, %1, %12 : vector<2x4x128xf32>
    %cst_7 = arith.constant 1.000000e+00 : f32
    %14 = vector.broadcast %cst_7 : f32 to vector<2x4x128xf32>
    %15 = arith.select %13, %1, %14 : vector<2x4x128xi1>, vector<2x4x128xf32>
    %cst_8 = arith.constant 0.000000e+00 : f32
    %16 = vector.broadcast %cst_8 : f32 to vector<2x4x128xf32>
    %17 = arith.cmpf ogt, %1, %16 : vector<2x4x128xf32>
    %18 = math.log %15 : vector<2x4x128xf32>
    %19 = arith.subf %18, %11 : vector<2x4x128xf32>
    %20 = arith.mulf %1, %19 : vector<2x4x128xf32>
    %cst_9 = arith.constant 0.000000e+00 : f32
    %21 = vector.broadcast %cst_9 : f32 to vector<2x4x128xf32>
    %22 = arith.select %17, %20, %21 : vector<2x4x128xi1>, vector<2x4x128xf32>
    %cst_10 = arith.constant dense<0.000000e+00> : vector<2x128xf32>
    %23 = vector.multi_reduction <add>, %22, %cst_10 [1] : vector<2x4x128xf32> to vector<2x128xf32>
    %c0_11 = arith.constant 0 : index
    %c0_12 = arith.constant 0 : index
    %24 = vector.load %arg4[%c0_11, %c0_12] : memref<2x128xf32, #tpu.memory_space<vmem>>, vector<2x128xf32>
    tpu.vector_store %arg4[%c0_11, %c0_12], %23 {strides = array<i32>} : memref<2x128xf32, #tpu.memory_space<vmem>>, vector<2x128xf32>,
    return
  }
  func.func @transform_0(%arg0: i32, %arg1: i32) -> (i32, i32, i32) {
    %c0_i32 = arith.constant 0 : i32
    %c0_i32_0 = arith.constant 0 : i32
    return %arg0, %c0_i32, %arg1 : i32, i32, i32
  }
  func.func @transform_1(%arg0: i32, %arg1: i32) -> (i32, i32, i32) {
    %c0_i32 = arith.constant 0 : i32
    %c0_i32_0 = arith.constant 0 : i32
    return %arg0, %c0_i32, %arg1 : i32, i32, i32
  }
  func.func @transform_2(%arg0: i32, %arg1: i32) -> (i32, i32) {
    %c0_i32 = arith.constant 0 : i32
    return %arg0, %arg1 : i32, i32
  }
}

</mosaic_0001>

<llo_original>
// kernel: tpu_custom_call.1
$region0: #{tpu_custom_call.1}
  #allocation0 [shape = 'u32[]', space=smem, size = 0x4, offset = 0x4, fixed_abs, tag = 'smem constant byte address 0x4 - core index']
  #allocation1 [shape = 'u32[144,128]{1,0:T(1,128)}', space=vmem, size = 0x12000, scoped, tag = 'internal scratch']
  %s0 = inlined_call_operand.hbm [shape: f32[2,4,256], index: 0, kind: input, shape index: {}]
  %s1 = inlined_call_operand.hbm [shape: f32[2,4,256], index: 1, kind: input, shape index: {}]
  %s2 = inlined_call_operand.hbm [shape: f32[2,256], index: 2, kind: output, shape index: {}]
  %s3 = sld [smem:[#allocation0]]
  $region49: #{tpu_custom_call.1} parent=0
    _
  %s5 = ssub.s32 1, %s3
  %s6 = scalar_select 0, %s5, %s3
  $region1: #{tpu_custom_call.1} parent=0
    #allocation2 [shape = 'u8[8192]{0}', space=vmem, size = 0x2000, scoped, tag = 'input window, operand 0']
    #allocation3 [shape = 's32[2]{0}', space=sflag, size = 0x8, scoped, tag = 'scoped memory for tpu_custom_call.1']
    #allocation4 [shape = 's32[2]{0}', space=sflag, size = 0x8, scoped, tag = 'scoped memory for tpu_custom_call.1']
    #allocation5 [shape = 'u8[8192]{0}', space=vmem, size = 0x2000, scoped, tag = 'input window, operand 1']
    #allocation6 [shape = 's32[2]{0}', space=sflag, size = 0x8, scoped, tag = 'scoped memory for tpu_custom_call.1']
    #allocation7 [shape = 'u8[2048]{0}', space=vmem, size = 0x800, scoped, tag = 'output window, operand 0']
    %7 = vsyncpa [#allocation3], 0
    %s8 = scalar_lea.sflag [#allocation3], 1
    %9 = vsyncpa %s8, 0
    %10 = vsyncpa [#allocation6], 0
    %s11 = scalar_lea.sflag [#allocation6], 1
    %12 = vsyncpa %s11, 0
    %13 = vsyncpa [#allocation4], 0
    %s14 = scalar_lea.sflag [#allocation4], 1
    %15 = vsyncpa %s14, 0
    loop: start=0, step=1, limit=4
    $region2: #{tpu_custom_call.1} parent=1 // loop_pre_header
      _
    $region3: #{tpu_custom_call.1} parent=1 // loop_header
      %s17 = sphi 0, %s21
      %p18 = scmp.ge.s32.totalorder %s17, 4
      %s24 = sphi 0, %s36
      %s25 = sphi 0, %s32
      %s26 = sphi 0, %s24
      %s27 = sphi 0, %s25
      %s28 = sphi 0, %s26
      %s29 = sphi 0, %s27
      %s41 = sphi 0, %s43
      %s44 = sphi 0, %s41
      %s45 = sphi 0, %s44
      %s61 = sphi 0, %s45
      %s69 = sphi 0, %s71
      %s72 = sphi 0, %s69
      %s73 = sphi 0, %s72
      %s89 = sphi 0, %s73
      %s97 = sphi 0, %s99
      %s100 = sphi 0, %s97
      %s101 = sphi 0, %s100
      %s117 = sphi 0, %s101
    $region4: #{tpu_custom_call.1} parent=1 // loop_header_branch
      %20 = sbr.rel (%p18) target = $region8
    $region5: #{tpu_custom_call.1} parent=1 // loop_body
      %s22 = ssub.s32 %s17, 1
      %s23 = ssub.s32 %s17, 2
      %s30 = sadd.s32 1, %s25
      %p31 = scmp.ge.s32.totalorder %s30, 2
      %s32 = scalar_select %p31, 0, %s30
      %s33 = sadd.s32 1, %s24
      %s34 = scalar_select %p31, %s33, %s24
      %p35 = scmp.ge.s32.totalorder %s34, 1
      %s36 = scalar_select %p35, 0, %s34
      %s37 = ssub.s32 %s24, %s36
      %s38 = ssub.s32 %s25, %s32
      %s39 = sor.u32 %s37, %s38
      %p40 = scmp.eq.s32.totalorder %s39, 0
      %s42 = sadd.s32 %s41, 1
      %s43 = scalar_select %p40, %s41, %s42
      %p46 = pneg %p40
      %p47 = scmp.eq.s32.totalorder %s17, 1
      %p48 = por %p46, %p47
      %p49 = scmp.ne.s32.totalorder %s41, %s44
      %p50 = scmp.eq.s32.totalorder %s17, 0
      %p51 = por %p49, %p50
      %p52 = scmp.ne.s32.totalorder %s41, %s44
      %p53 = scmp.eq.s32.totalorder %s22, 1
      %p54 = por %p52, %p53
      %p55 = scmp.ne.s32.totalorder %s44, %s45
      %p56 = scmp.eq.s32.totalorder %s22, 0
      %p57 = por %p55, %p56
      %p58 = scmp.ne.s32.totalorder %s44, %s45
      %p59 = scmp.eq.s32.totalorder %s23, 1
      %p60 = por %p58, %p59
      %p62 = scmp.ne.s32.totalorder %s45, %s61
      %p63 = scmp.eq.s32.totalorder %s23, 0
      %p64 = por %p62, %p63
      %s65 = ssub.s32 %s24, %s36
      %s66 = ssub.s32 %s25, %s32
      %s67 = sor.u32 %s65, %s66
      %p68 = scmp.eq.s32.totalorder %s67, 0
      %s70 = sadd.s32 %s69, 1
      %s71 = scalar_select %p68, %s69, %s70
      %p74 = pneg %p68
      %p75 = scmp.eq.s32.totalorder %s17, 1
      %p76 = por %p74, %p75
      %p77 = scmp.ne.s32.totalorder %s69, %s72
      %p78 = scmp.eq.s32.totalorder %s17, 0
      %p79 = por %p77, %p78
      %p80 = scmp.ne.s32.totalorder %s69, %s72
      %p81 = scmp.eq.s32.totalorder %s22, 1
      %p82 = por %p80, %p81
      %p83 = scmp.ne.s32.totalorder %s72, %s73
      %p84 = scmp.eq.s32.totalorder %s22, 0
      %p85 = por %p83, %p84
      %p86 = scmp.ne.s32.totalorder %s72, %s73
      %p87 = scmp.eq.s32.totalorder %s23, 1
      %p88 = por %p86, %p87
      %p90 = scmp.ne.s32.totalorder %s73, %s89
      %p91 = scmp.eq.s32.totalorder %s23, 0
      %p92 = por %p90, %p91
      %s93 = ssub.s32 %s24, %s36
      %s94 = ssub.s32 %s25, %s32
      %s95 = sor.u32 %s93, %s94
      %p96 = scmp.eq.s32.totalorder %s95, 0
      %s98 = sadd.s32 %s97, 1
      %s99 = scalar_select %p96, %s97, %s98
      %p102 = pneg %p96
      %p103 = scmp.eq.s32.totalorder %s17, 1
      %p104 = por %p102, %p103
      %p105 = scmp.ne.s32.totalorder %s97, %s100
      %p106 = scmp.eq.s32.totalorder %s17, 0
      %p107 = por %p105, %p106
      %p108 = scmp.ne.s32.totalorder %s97, %s100
      %p109 = scmp.eq.s32.totalorder %s22, 1
      %p110 = por %p108, %p109
      %p111 = scmp.ne.s32.totalorder %s100, %s101
      %p112 = scmp.eq.s32.totalorder %s22, 0
      %p113 = por %p111, %p112
      %p114 = scmp.ne.s32.totalorder %s100, %s101
      %p115 = scmp.eq.s32.totalorder %s23, 1
      %p116 = por %p114, %p115
      %p118 = scmp.ne.s32.totalorder %s101, %s117
      %p119 = scmp.eq.s32.totalorder %s23, 0
      %p120 = por %p118, %p119
      %p121 = scmp.le.s32.totalorder 1, %s17
      %p122 = scmp.lt.s32.totalorder %s17, 3
      %p123 = pnand %p121, %p122
      %p124 = pneg %p123
      // Predicated region
      $region9: #{tpu_custom_call.1} parent=5 // pred_check
        _
      $region10: #{tpu_custom_call.1} parent=5 // pred_check_branch
        %126 = sbr.rel (%p123) target = $region12
      $region11: #{tpu_custom_call.1} parent=5 // pred_region
        %s127 = ssub.s32 %s17, 1
      $region12: #{tpu_custom_call.1} parent=5 // pred_fallthru
        _
      %p128 = scmp.lt.s32.totalorder %s17, 2
      // Predicated region
      $region13: #{tpu_custom_call.1} parent=5 // pred_check
        %p129 = pneg %p128
      $region14: #{tpu_custom_call.1} parent=5 // pred_check_branch
        %131 = sbr.rel (%p129) target = $region16
      $region15: #{tpu_custom_call.1} parent=5 // pred_region
        // Predicated region
        $region17: #{tpu_custom_call.1} parent=15 // pred_check
          %p132 = pneg %p51
        $region18: #{tpu_custom_call.1} parent=15 // pred_check_branch
          %134 = sbr.rel (%p132) target = $region20
        $region19: #{tpu_custom_call.1} parent=15 // pred_region
          %s135 = sand.u32 %s41, 1
          %s136 = scalar_lea.sflag [#allocation3], %s135
          %s137 = sand.u32 %s41, 1
          %s138 = smul.addr %s137, 8
          %s139 = scalar_lea.vmem [#allocation2], %s138
          %s140 = smul.u32 2, %s24
          %s142 = ssub.s32 128, 128
          %143 = vsyncadd %s136, %s142
          %s144 = smul.addr %s140, 2
          %s145 = sadd.s32 %s25, %s144
          %s146 = smul.addr %s145, 64
          %s147 = scalar_lea.hbm %s0, %s146
          %s148 = sshll.u32 %s139, 4
          %s149 = int_to_ptr.vmem [resolvable:$true] %s148
          %154 = dma.hbm_to_vmem [thread:$0]  %s147, 128, %s149, %s136, 128, 64, 4
        $region20: #{tpu_custom_call.1} parent=15 // pred_fallthru
          _
        // Predicated region
        $region21: #{tpu_custom_call.1} parent=15 // pred_check
          %p155 = pneg %p79
        $region22: #{tpu_custom_call.1} parent=15 // pred_check_branch
          %157 = sbr.rel (%p155) target = $region24
        $region23: #{tpu_custom_call.1} parent=15 // pred_region
          %s158 = sand.u32 %s69, 1
          %s159 = scalar_lea.sflag [#allocation6], %s158
          %s160 = sand.u32 %s69, 1
          %s161 = smul.addr %s160, 8
          %s162 = scalar_lea.vmem [#allocation5], %s161
          %s163 = smul.u32 2, %s24
          %s165 = ssub.s32 128, 128
          %166 = vsyncadd %s159, %s165
          %s167 = smul.addr %s163, 2
          %s168 = sadd.s32 %s25, %s167
          %s169 = smul.addr %s168, 64
          %s170 = scalar_lea.hbm %s1, %s169
          %s171 = sshll.u32 %s162, 4
          %s172 = int_to_ptr.vmem [resolvable:$true] %s171
          %177 = dma.hbm_to_vmem [thread:$0]  %s170, 128, %s172, %s159, 128, 64, 4
        $region24: #{tpu_custom_call.1} parent=15 // pred_fallthru
          _
      $region16: #{tpu_custom_call.1} parent=5 // pred_fallthru
        _
      %p178 = scmp.le.s32.totalorder 1, %s17
      %p179 = scmp.lt.s32.totalorder %s17, 3
      %p180 = pnand %p178, %p179
      %p181 = pneg %p180
      // Predicated region
      $region25: #{tpu_custom_call.1} parent=5 // pred_check
        _
      $region26: #{tpu_custom_call.1} parent=5 // pred_check_branch
        %183 = sbr.rel (%p180) target = $region28
      $region27: #{tpu_custom_call.1} parent=5 // pred_region
        %s184 = ssub.s32 %s17, 1
        %s185 = sand.u32 %s44, 1
        %s186 = scalar_lea.sflag [#allocation3], %s185
        %s187 = sand.u32 %s44, 1
        %s188 = smul.addr %s187, 8
        %s189 = scalar_lea.vmem [#allocation2], %s188
        // Predicated region
        $region29: #{tpu_custom_call.1} parent=27 // pred_check
          %p190 = pneg %p57
        $region30: #{tpu_custom_call.1} parent=27 // pred_check_branch
          %192 = sbr.rel (%p190) target = $region32
        $region31: #{tpu_custom_call.1} parent=27 // pred_region
          %193 = dma.done %s186, 128
        $region32: #{tpu_custom_call.1} parent=27 // pred_fallthru
          _
        %s194 = sand.u32 %s72, 1
        %s195 = scalar_lea.sflag [#allocation6], %s194
        %s196 = sand.u32 %s72, 1
        %s197 = smul.addr %s196, 8
        %s198 = scalar_lea.vmem [#allocation5], %s197
        // Predicated region
        $region33: #{tpu_custom_call.1} parent=27 // pred_check
          %p199 = pneg %p85
        $region34: #{tpu_custom_call.1} parent=27 // pred_check_branch
          %201 = sbr.rel (%p199) target = $region36
        $region35: #{tpu_custom_call.1} parent=27 // pred_region
          %202 = dma.done %s195, 128
        $region36: #{tpu_custom_call.1} parent=27 // pred_fallthru
          _
        %s203 = sand.u32 %s44, 1
        %s204 = scalar_lea.sflag [#allocation3], %s203
        %s205 = sand.u32 %s44, 1
        %s206 = smul.addr %s205, 8
        %s207 = scalar_lea.vmem [#allocation2], %s206
        %p208 = pneg %p57
        %p209 = pneg %p54
        %s210 = sand.u32 %s72, 1
        %s211 = scalar_lea.sflag [#allocation6], %s210
        %s212 = sand.u32 %s72, 1
        %s213 = smul.addr %s212, 8
        %s214 = scalar_lea.vmem [#allocation5], %s213
        %p215 = pneg %p85
        %p216 = pneg %p82
        %p217 = pneg %p113
        %p218 = pneg %p110
        %s219 = sand.u32 %s100, 1
        %s220 = scalar_lea.sflag [#allocation4], %s219
        %s221 = sand.u32 %s100, 1
        %s222 = smul.addr %s221, 2
        %s223 = scalar_lea.vmem [#allocation7], %s222
        %s224 = smul.u32 2, %s26
        %s225 = smul.u32 2, %s26
        %v226 = vld [vmem:[%s189] sm:$0xf]
        %v227 = vld [vmem:[%s189 + $0x4] sm:$0xf]
        %v228 = vld [vmem:[%s198] sm:$0xf]
        %v229 = vld [vmem:[%s198 + $0x4] sm:$0xf]
        %vm230 = vcmask 1043456
        %v231 = vsel %vm230, %v226, -inf
        %v232 = vrot.slane %v231, 4
        %v233 = vmax.f32 %v231, %v232
        %v234 = vrot.slane %v233, 2
        %v235 = vmax.f32 %v233, %v234
        %v236 = vrot.slane %v235, 1
        %v237 = vmax.f32 %v235, %v236
        %v238 = vsel %vm230, %v227, -inf
        %v239 = vrot.slane %v238, 4
        %v240 = vmax.f32 %v238, %v239
        %v241 = vrot.slane %v240, 2
        %v242 = vmax.f32 %v240, %v241
        %v243 = vrot.slane %v242, 1
        %v244 = vmax.f32 %v242, %v243
        %v245 = vsub.f32 %v226, %v237
        %v246 = vsub.f32 %v227, %v244
        %v247 = vmul.f32 %v245, 1.442695
        %v248 = vpow.pop %v247
        %v249 = vmul.f32 %v246, 1.442695
        %v250 = vpow.pop %v249
        %v251 = vsel %vm230, %v248, 0.0
        %v252 = vrot.slane %v251, 4
        %v253 = vadd.f32 %v251, %v252
        %v254 = vrot.slane %v253, 2
        %v255 = vadd.f32 %v253, %v254
        %v256 = vrot.slane %v255, 1
        %v257 = vadd.f32 %v255, %v256
        %v258 = vsel %vm230, %v250, 0.0
        %v259 = vrot.slane %v258, 4
        %v260 = vadd.f32 %v258, %v259
        %v261 = vrot.slane %v260, 2
        %v262 = vadd.f32 %v260, %v261
        %v263 = vrot.slane %v262, 1
        %v264 = vadd.f32 %v262, %v263
        %v265 = vlog2.pop %v257
        %v266 = vmul.f32 %v265, 0.6931472
        %v267 = vlog2.pop %v264
        %v268 = vmul.f32 %v267, 0.6931472
        %v269 = vsub.f32 %v245, %v266
        %v270 = vsub.f32 %v246, %v268
        %vm271 = vcmp.gt.f32.partialorder %v228, 0.0
        %vm272 = vcmp.gt.f32.partialorder %v229, 0.0
        %v273 = vsel %vm271, %v228, 1.0
        %v274 = vsel %vm272, %v229, 1.0
        %v275 = vlog2.pop %v273
        %v276 = vmul.f32 %v275, 0.6931472
        %v277 = vlog2.pop %v274
        %v278 = vmul.f32 %v277, 0.6931472
        %v279 = vsub.f32 %v276, %v269
        %v280 = vsub.f32 %v278, %v270
        %v281 = vmul.f32 %v228, %v279
        %v282 = vmul.f32 %v229, %v280
        %v283 = vsel %vm271, %v281, 0.0
        %v284 = vsel %vm272, %v282, 0.0
        %v285 = vsel %vm230, %v283, 0.0
        %v286 = vrot.slane %v285, 4
        %v287 = vadd.f32 %v285, %v286
        %v288 = vrot.slane %v287, 2
        %v289 = vadd.f32 %v287, %v288
        %v290 = vrot.slane %v289, 1
        %v291 = vadd.f32 %v289, %v290
        %v292 = vsel %vm230, %v284, 0.0
        %v293 = vrot.slane %v292, 4
        %v294 = vadd.f32 %v292, %v293
        %v295 = vrot.slane %v294, 2
        %v296 = vadd.f32 %v294, %v295
        %v297 = vrot.slane %v296, 1
        %v298 = vadd.f32 %v296, %v297
        %vm301 = vcmask 1041409
        %v302 = vsel %vm301, %v298, %v291
        %304 = vst [vmem:[%s223] sm:$0x3] %v302
        %s305 = sand.u32 %s100, 1
        %s306 = scalar_lea.sflag [#allocation4], %s305
        %s307 = sand.u32 %s100, 1
        %s308 = smul.addr %s307, 2
        %s309 = scalar_lea.vmem [#allocation7], %s308
        // Predicated region
        $region37: #{tpu_custom_call.1} parent=27 // pred_check
          %p310 = pneg %p110
        $region38: #{tpu_custom_call.1} parent=27 // pred_check_branch
          %312 = sbr.rel (%p310) target = $region40
        $region39: #{tpu_custom_call.1} parent=27 // pred_region
          %s314 = ssub.s32 32, 32
          %315 = vsyncadd %s306, %s314
          %s316 = smul.addr %s26, 2
          %s317 = sadd.s32 %s27, %s316
          %s318 = smul.addr %s317, 32
          %s319 = scalar_lea.hbm %s2, %s318
          %s321 = sshll.u32 %s309, 4
          %s322 = int_to_ptr.vmem [resolvable:$true] %s321
          %324 = dma.vmem_to_hbm [thread:$0]  %s322, 32, %s319, %s306
        $region40: #{tpu_custom_call.1} parent=27 // pred_fallthru
          _
      $region28: #{tpu_custom_call.1} parent=5 // pred_fallthru
        _
      %p325 = scmp.le.s32.totalorder 2, %s17
      // Predicated region
      $region41: #{tpu_custom_call.1} parent=5 // pred_check
        %p326 = pneg %p325
      $region42: #{tpu_custom_call.1} parent=5 // pred_check_branch
        %328 = sbr.rel (%p326) target = $region44
      $region43: #{tpu_custom_call.1} parent=5 // pred_region
        %s329 = ssub.s32 %s17, 2
        // Predicated region
        $region45: #{tpu_custom_call.1} parent=43 // pred_check
          %p330 = pneg %p116
        $region46: #{tpu_custom_call.1} parent=43 // pred_check_branch
          %332 = sbr.rel (%p330) target = $region48
        $region47: #{tpu_custom_call.1} parent=43 // pred_region
          %s333 = sand.u32 %s101, 1
          %s334 = scalar_lea.sflag [#allocation4], %s333
          %s335 = sand.u32 %s101, 1
          %s336 = smul.addr %s335, 2
          %s337 = scalar_lea.vmem [#allocation7], %s336
          %338 = dma.done %s334, 32
        $region48: #{tpu_custom_call.1} parent=43 // pred_fallthru
          _
      $region44: #{tpu_custom_call.1} parent=5 // pred_fallthru
        _
    $region6: #{tpu_custom_call.1} parent=1 // loop_footer
      %s21 = sadd.s32 1, %s17
    $region7: #{tpu_custom_call.1} parent=1 // loop_footer_branch
      %16 = sbr.rel target = $region3
    $region8: #{tpu_custom_call.1} parent=1 // loop_exit
      _
    %339 = vsyncpa [#allocation3], 1
    %s340 = scalar_lea.sflag [#allocation3], 1
    %341 = vsyncpa %s340, 1
    %342 = vsyncpa [#allocation6], 1
    %s343 = scalar_lea.sflag [#allocation6], 1
    %344 = vsyncpa %s343, 1
    %345 = vsyncpa [#allocation4], 1
    %s346 = scalar_lea.sflag [#allocation4], 1
    %347 = vsyncpa %s346, 1

</llo_original>
